<compile_context>
chip_gen: v7x
topology: tpu7x:2x2x1
jax: 0.10.0
libtpu: 0.0.40
codegen_flags: <defaults>
</compile_context>

<pallas_src>
import functools
import math

import jax
import jax.numpy as jnp
import numpy as np
from jax.experimental import pallas as pl
from jax.experimental.pallas import tpu as pltpu


def _rope_cache_kernel(off_ref, inv_ref, cos_ref, sin_ref, *, fold):
    # cos_ref / sin_ref: (block_rows, lanes) tile of the folded cache slab.
    # off_ref: (1, lanes) f32, per-column fold offset (0..fold-1, repeated dim).
    # inv_ref: (1, lanes) f32, inv_freq duplicated across the two halves and
    #          tiled `fold` times (so a single broadcasted multiply covers the
    #          cat(freqs, freqs) layout).
    blk, _ = cos_ref.shape
    row0 = (pl.program_id(0) * blk).astype(jnp.float32)
    row = (jax.lax.broadcasted_iota(jnp.int32, (blk, 1), 0)
           .astype(jnp.float32) + row0)            # slab-row index (blk, 1)
    # Absolute token position per element (exact in f32 for seq_len < 2**24).
    pos = row * float(fold) + off_ref[...]          # (blk, lanes) via broadcast
    ang = pos * inv_ref[...]                        # == outer(t, inv_freq) cols
    cos_ref[...] = jnp.cos(ang).astype(cos_ref.dtype)
    sin_ref[...] = jnp.sin(ang).astype(sin_ref.dtype)


def _sublane_multiple(dtype):
    return {4: 8, 2: 16, 1: 32}.get(jnp.dtype(dtype).itemsize, 8)


def _pick_block_rows(rows, lanes, itemsize, sub, requested=None):
    if requested is None:
        # 2 outputs x 2 pipeline buffers; stay well under scoped-VMEM defaults
        # on all generations (v7x included).
        budget = 8 << 20
        requested = min(1024, max(sub, budget // (4 * lanes * itemsize)))
    if requested >= rows:
        return rows                       # full-extent block is always legal
    blk = max(sub, (requested // sub) * sub)
    return rows if blk >= rows else blk


def phi_rotary_embedding(x, seq_len, *, dim, base=10000.0, block_rows=None):
    """Returns (cos, sin), each of shape (seq_len, dim), dtype == x.dtype."""
    assert dim % 2 == 0
    assert 1 <= seq_len < (1 << 24), "positions reconstructed in f32"
    out_dtype = x.dtype
    itemsize = jnp.dtype(out_dtype).itemsize
    sub = _sublane_multiple(out_dtype)

    # Fold factor so the slab's last dim is a multiple of 128 lanes.
    fold = 128 // math.gcd(128, dim)
    if dim >= 128 or seq_len % fold != 0:
        fold = 1                           # correct fallback (just lane-sparse)
    rows = seq_len // fold
    lanes = fold * dim

    blk = _pick_block_rows(rows, lanes, itemsize, sub, block_rows)
    grid = (pl.cdiv(rows, blk),)

    # Tiny per-column constants (f32): tiled inv_freq and fold offsets.
    inv_freq = 1.0 / (base ** (np.arange(0, dim, 2, dtype=np.float32) / dim))
    inv_full = np.concatenate([inv_freq, inv_freq])              # (dim,)
    inv_tiled = jnp.asarray(np.tile(inv_full, fold)[None, :])    # (1, lanes)
    fold_off = jnp.asarray(
        np.repeat(np.arange(fold, dtype=np.float32), dim)[None, :])  # (1, lanes)

    kernel = functools.partial(_rope_cache_kernel, fold=fold)
    cos_slab, sin_slab = pl.pallas_call(
        kernel,
        out_shape=(
            jax.ShapeDtypeStruct((rows, lanes), out_dtype),
            jax.ShapeDtypeStruct((rows, lanes), out_dtype),
        ),
        grid_spec=pltpu.PrefetchScalarGridSpec(
            num_scalar_prefetch=0,
            grid=grid,
            in_specs=[
                pl.BlockSpec((1, lanes), lambda i: (0, 0)),
                pl.BlockSpec((1, lanes), lambda i: (0, 0)),
            ],
            out_specs=[
                pl.BlockSpec((blk, lanes), lambda i: (i, 0)),
                pl.BlockSpec((blk, lanes), lambda i: (i, 0)),
            ],
        ),
        compiler_params=pltpu.CompilerParams(
            dimension_semantics=("parallel",)),
    )(fold_off, inv_tiled)

    # Free, layout-preserving reshape of the folded slab back to (seq_len, dim).
    return cos_slab.reshape(seq_len, dim), sin_slab.reshape(seq_len, dim)


def _reference(seq_len, dim, base, dtype):
    inv_freq = 1.0 / (base ** (np.arange(0, dim, 2, dtype=np.float32) / dim))
    t = np.arange(seq_len, dtype=np.float32)
    freqs = np.outer(t, inv_freq)
    emb = np.concatenate([freqs, freqs], axis=-1)
    return np.cos(emb).astype(dtype), np.sin(emb).astype(dtype)


if __name__ == "__main__":
    key = jax.random.PRNGKey(0)
    base = 10000.0

    # Test 1: small shapes consistent with the module's forward, f32.
    batch, heads, seq, head_dim = 2, 4, 8, 32
    x = jax.random.normal(key, (batch, heads, seq, head_dim), dtype=jnp.float32)
    cos, sin = phi_rotary_embedding(x, seq_len=seq, dim=head_dim, base=base)
    cos = jax.block_until_ready(cos)
    sin = jax.block_until_ready(sin)
    cos_ref, sin_ref = _reference(seq, head_dim, base, np.float32)
    np.testing.assert_allclose(np.asarray(cos), cos_ref, rtol=0, atol=1e-5)
    np.testing.assert_allclose(np.asarray(sin), sin_ref, rtol=0, atol=1e-5)
    assert cos.shape == (seq, head_dim) and sin.shape == (seq, head_dim)
    assert cos.dtype == x.dtype and sin.dtype == x.dtype

    # Test 2: multi-step grid with a partial tail block (rows=100, blk=32), f32.
    seq2, dim2 = 200, 64
    x2 = jnp.ones((1, 1, seq2, dim2), dtype=jnp.float32)
    cos2, sin2 = phi_rotary_embedding(x2, seq_len=seq2, dim=dim2, base=base,
                                      block_rows=32)
    cos2 = jax.block_until_ready(cos2)
    sin2 = jax.block_until_ready(sin2)
    c2, s2 = _reference(seq2, dim2, base, np.float32)
    np.testing.assert_allclose(np.asarray(cos2), c2, rtol=0, atol=1e-4)
    np.testing.assert_allclose(np.asarray(sin2), s2, rtol=0, atol=1e-4)

    # Test 3: bf16 outputs (16-row sublane multiple) with a partial tail block.
    seq3, dim3 = 264, 32
    x3 = jnp.ones((1, 1, seq3, dim3), dtype=jnp.bfloat16)
    cos3, sin3 = phi_rotary_embedding(x3, seq_len=seq3, dim=dim3, base=base,
                                      block_rows=16)
    cos3 = jax.block_until_ready(cos3)
    sin3 = jax.block_until_ready(sin3)
    c3, s3 = _reference(seq3, dim3, base, np.float32)
    np.testing.assert_allclose(np.asarray(cos3.astype(jnp.float32)), c3,
                               rtol=0, atol=2e-2)
    np.testing.assert_allclose(np.asarray(sin3.astype(jnp.float32)), s3,
                               rtol=0, atol=2e-2)
    assert cos3.dtype == jnp.bfloat16 and sin3.dtype == jnp.bfloat16

    print("KERNEL_OK")
</pallas_src>

<mosaic_0001>
module attributes {stable_mosaic.version = 11 : i64} {
  func.func @_rope_cache_kernel(%arg0: i32, %arg1: memref<1x128xf32, #tpu.memory_space<vmem>>, %arg2: memref<1x128xf32, #tpu.memory_space<vmem>>, %arg3: memref<2x128xf32, #tpu.memory_space<vmem>>, %arg4: memref<2x128xf32, #tpu.memory_space<vmem>>) attributes {dimension_semantics = [#tpu.dimension_semantics<parallel>], iteration_bounds = array<i64: 1>, scalar_prefetch = 0 : i64, scratch_operands = 0 : i64, tpu.core_type = #tpu.core_type<tc>, window_params = [{pipeline_mode = #tpu.pipeline_mode<synchronous>, transform_indices = @transform_0, window_bounds = array<i64: 1, 128>}, {pipeline_mode = #tpu.pipeline_mode<synchronous>, transform_indices = @transform_1, window_bounds = array<i64: 1, 128>}, {transform_indices = @transform_2, window_bounds = array<i64: 2, 128>}, {transform_indices = @transform_3, window_bounds = array<i64: 2, 128>}]} {
    %c2_i32 = arith.constant 2 : i32
    %0 = arith.muli %arg0, %c2_i32 : i32
    %1 = arith.sitofp %0 : i32 to f32
    %2 = tpu.iota {dimensions = array<i32: 0>} : vector<2x1xi32>
    %3 = arith.sitofp %2 : vector<2x1xi32> to vector<2x1xf32>
    %4 = vector.broadcast %1 : f32 to vector<2x1xf32>
    %5 = arith.addf %3, %4 : vector<2x1xf32>
    %cst = arith.constant 4.000000e+00 : f32
    %6 = vector.broadcast %cst : f32 to vector<2x1xf32>
    %7 = arith.mulf %5, %6 : vector<2x1xf32>
    %c0 = arith.constant 0 : index
    %c0_0 = arith.constant 0 : index
    %8 = vector.load %arg1[%c0, %c0_0] : memref<1x128xf32, #tpu.memory_space<vmem>>, vector<1x128xf32>
    %9 = vector.broadcast %7 : vector<2x1xf32> to vector<2x128xf32>
    %10 = vector.broadcast %8 : vector<1x128xf32> to vector<2x128xf32>
    %11 = arith.addf %9, %10 : vector<2x128xf32>
    %c0_1 = arith.constant 0 : index
    %c0_2 = arith.constant 0 : index
    %12 = vector.load %arg2[%c0_1, %c0_2] : memref<1x128xf32, #tpu.memory_space<vmem>>, vector<1x128xf32>
    %13 = vector.broadcast %12 : vector<1x128xf32> to vector<2x128xf32>
    %14 = arith.mulf %11, %13 : vector<2x128xf32>
    %15 = math.cos %14 : vector<2x128xf32>
    %c0_3 = arith.constant 0 : index
    %c0_4 = arith.constant 0 : index
    %16 = vector.load %arg3[%c0_3, %c0_4] : memref<2x128xf32, #tpu.memory_space<vmem>>, vector<2x128xf32>
    tpu.vector_store %arg3[%c0_3, %c0_4], %15 {strides = array<i32>} : memref<2x128xf32, #tpu.memory_space<vmem>>, vector<2x128xf32>,
    %17 = math.sin %14 : vector<2x128xf32>
    %c0_5 = arith.constant 0 : index
    %c0_6 = arith.constant 0 : index
    %18 = vector.load %arg4[%c0_5, %c0_6] : memref<2x128xf32, #tpu.memory_space<vmem>>, vector<2x128xf32>
    tpu.vector_store %arg4[%c0_5, %c0_6], %17 {strides = array<i32>} : memref<2x128xf32, #tpu.memory_space<vmem>>, vector<2x128xf32>,
    return
  }
  func.func @transform_0(%arg0: i32) -> (i32, i32) {
    %c0_i32 = arith.constant 0 : i32
    %c0_i32_0 = arith.constant 0 : i32
    %c0_i32_1 = arith.constant 0 : i32
    return %c0_i32, %c0_i32_0 : i32, i32
  }
  func.func @transform_1(%arg0: i32) -> (i32, i32) {
    %c0_i32 = arith.constant 0 : i32
    %c0_i32_0 = arith.constant 0 : i32
    %c0_i32_1 = arith.constant 0 : i32
    return %c0_i32, %c0_i32_0 : i32, i32
  }
  func.func @transform_2(%arg0: i32) -> (i32, i32) {
    %c0_i32 = arith.constant 0 : i32
    %c0_i32_0 = arith.constant 0 : i32
    return %arg0, %c0_i32 : i32, i32
  }
  func.func @transform_3(%arg0: i32) -> (i32, i32) {
    %c0_i32 = arith.constant 0 : i32
    %c0_i32_0 = arith.constant 0 : i32
    return %arg0, %c0_i32 : i32, i32
  }
}

</mosaic_0001>

<llo_original>
// kernel: tpu_custom_call.1
$region0: #{tpu_custom_call.1}
  #allocation0 [shape = 'u32[]', space=smem, size = 0x4, offset = 0x4, fixed_abs, tag = 'smem constant byte address 0x4 - core index']
  #allocation1 [shape = 'u32[144,128]{1,0:T(1,128)}', space=vmem, size = 0x12000, scoped, tag = 'internal scratch']
  %s0 = inlined_call_operand.hbm [shape: f32[1,128], index: 0, kind: input, shape index: {}]
  %s1 = inlined_call_operand.vmem [shape: f32[1,128], index: 1, kind: input, shape index: {}]
  %s2 = inlined_call_operand.hbm [shape: f32[2,128], index: 2, kind: output, shape index: {0}]
  %s3 = inlined_call_operand.hbm [shape: f32[2,128], index: 3, kind: output, shape index: {1}]
  %4 = xla_tuple %s2, %s3
  %s5 = sld [smem:[#allocation0]]
  $region30: #{tpu_custom_call.1} parent=0
    _
  %s7 = ssub.s32 1, %s5
  %s8 = scalar_select 0, %s7, %s5
  $region1: #{tpu_custom_call.1} parent=0
    #allocation2 [shape = 'u8[512]{0}', space=vmem, size = 0x400, scoped, tag = 'input window, operand 0, single buffered']
    #allocation3 [shape = 's32[1]{0}', space=sflag, size = 0x4, scoped, tag = 'scoped memory for tpu_custom_call.1']
    #allocation4 [shape = 's32[1]{0}', space=sflag, size = 0x4, scoped, tag = 'scoped memory for tpu_custom_call.1']
    #allocation5 [shape = 'u8[1024]{0}', space=vmem, size = 0x400, scoped, tag = 'output window, operand 0, single buffered']
    #allocation6 [shape = 'u8[1024]{0}', space=vmem, size = 0x400, scoped, tag = 'output window, operand 1, single buffered']
    #allocation7 [shape = 's32[1]{0}', space=sflag, size = 0x4, scoped, tag = 'scoped memory for tpu_custom_call.1']
    %9 = vsyncpa [#allocation3], 0
    %10 = vsyncpa [#allocation4], 0
    %11 = vsyncpa [#allocation7], 0
    // Predicated region
    $region2: #{tpu_custom_call.1} parent=1 // pred_check
      _
    $region3: #{tpu_custom_call.1} parent=1 // pred_check_branch
      %13 = sbr.rel (0) target = $region5
    $region4: #{tpu_custom_call.1} parent=1 // pred_region
      %s15 = ssub.s32 16, 16
      %16 = vsyncadd [#allocation3], %s15
      %s18 = sshll.u32 [#allocation2], 4
      %s19 = int_to_ptr.vmem [resolvable:$true] %s18
      %21 = dma.hbm_to_vmem [thread:$0]  %s0, 16, %s19, [#allocation3]
    $region5: #{tpu_custom_call.1} parent=1 // pred_fallthru
      _
    // Predicated region
    $region6: #{tpu_custom_call.1} parent=1 // pred_check
      _
    $region7: #{tpu_custom_call.1} parent=1 // pred_check_branch
      %23 = sbr.rel (0) target = $region9
    $region8: #{tpu_custom_call.1} parent=1 // pred_region
      _
    $region9: #{tpu_custom_call.1} parent=1 // pred_fallthru
      _
    // Predicated region
    $region10: #{tpu_custom_call.1} parent=1 // pred_check
      _
    $region11: #{tpu_custom_call.1} parent=1 // pred_check_branch
      %25 = sbr.rel (0) target = $region13
    $region12: #{tpu_custom_call.1} parent=1 // pred_region
      %26 = dma.done [#allocation3], 16
    $region13: #{tpu_custom_call.1} parent=1 // pred_fallthru
      _
    %s27 = smul.u32 0, 2
    %s28 = scvt.s32.f32 %s27
    %v29 = vlaneseq
    %v30 = vshrl.u32 %v29, 7
    %v31 = vcvt.s32.f32 %v30
    %v32 = vstv %s28
    %v33 = vadd.f32 %v31, %v32
    %v34 = vmul.f32 %v33, 4.0
    %v35 = vld [vmem:[#allocation2] sm:$0x1]
    %v37 = vlaneseq
    %v38 = vshrl.u32 %v37, 7
    %v39 = vsub.s32 0, %v38
    %v40 = vrot.slane %v35, %v39
    %v42 = vadd.f32 %v34, %v40
    %v43 = vld [vmem:[%s1] sm:$0x1]
    %v45 = vlaneseq
    %v46 = vshrl.u32 %v45, 7
    %v47 = vsub.s32 0, %v46
    %v48 = vrot.slane %v43, %v47
    %v50 = vmul.f32 %v42, %v48
    %v51 = vand.u32 2147483647, %v50
    %vm52 = vcmp.le.f32.partialorder %v51, 0.7853982
    %vm53 = vcmp.lt.s32.totalorder %v50, 0
    %v54 = vand.u32 %v50, 2139095040
    %v55 = vshrl.u32 %v54, 23
    %v56 = vsub.s32 %v55, 127
    %v57 = vand.u32 2147483647, %v50
    %v58 = vand.u32 %v57, 8388607
    %v59 = vor.u32 %v58, 8388608
    %v60 = vsub.s32 0, %v59
    %v61 = vadd.s32 %v56, 1
    %vm62 = vcmp.gt.s32.totalorder %v61, 0
    %v63 = vsel %vm62, %v61, 0
    %v64 = vshrl.u32 %v63, 5
    %v65 = vand.u32 %v63, 31
    %v66 = vsub.s32 32, %v65
    %v67 = vshrl.u32 683565275, %v66
    %v68 = vshll.u32 683565275, %v65
    %v69 = vshrl.u32 2475754826, %v66
    %v70 = vor.u32 %v68, %v69
    %v71 = vshll.u32 2475754826, %v65
    %v72 = vshrl.u32 2131351028, %v66
    %v73 = vor.u32 %v71, %v72
    %v74 = vshll.u32 2131351028, %v65
    %v75 = vshrl.u32 2102212464, %v66
    %v76 = vor.u32 %v74, %v75
    %v77 = vshll.u32 2102212464, %v65
    %v78 = vshrl.u32 920167782, %v66
    %v79 = vor.u32 %v77, %v78
    %v80 = vshll.u32 920167782, %v65
    %v81 = vshrl.u32 1326507024, %v66
    %v82 = vor.u32 %v80, %v81
    %vm83 = vcmp.lt.s32.totalorder %v64, 1
    %vm84 = vcmp.lt.s32.totalorder %v64, 2
    %vm85 = vcmp.lt.s32.totalorder %v64, 3
    %vm86 = vcmp.lt.s32.totalorder %v64, 4
    %v87 = vsel %vm83, %v67, %v70
    %v88 = vsel %vm86, %v76, 2102212464
    %v89 = vsel %vm85, %v73, %v88
    %v90 = vsel %vm84, %v87, %v89
    %v91 = vsel %vm83, %v70, %v73
    %v92 = vsel %vm86, %v79, 920167782
    %v93 = vsel %vm85, %v76, %v92
    %v94 = vsel %vm84, %v91, %v93
    %v95 = vsel %vm83, %v73, %v76
    %v96 = vsel %vm86, %v82, 1326507024
    %v97 = vsel %vm85, %v79, %v96
    %v98 = vsel %vm84, %v95, %v97
    %v99 = vshll.u32 %v59, 8
    %v100 = vmul.u32.u64.compose %v99, %v98
    %v101 = vextract.low.u32 %v100
    %v102 = vextract.high.u32 %v100
    %v103 = vmul.u32.u64.compose %v99, %v94
    %v104 = vextract.low.u32 %v103
    %v105 = vextract.high.u32 %v103
    %v106 = vmul.u32 %v99, %v90
    %v107 = vadd.s32 %v102, %v104
    %vm108 = vc.u32 %v102, %v104
    %v109 = vadd.s32 %v105, 1
    %v110 = vsel %vm108, %v109, %v105
    %v111 = vadd.s32 %v106, %v110
    %v112 = vadd.s32 %v111, 536870912
    %v113 = vshrl.u32 %v112, 30
    %v114 = vshll.u32 %v113, 30
    %v115 = vsub.s32 %v111, %v114
    %vm116 = vcmp.lt.s32.totalorder %v115, 0
    %v117 = vsub.s32 0, %v115
    %v118 = vsel %vm116, %v117, %v115
    %v119 = vclz %v118
    %v120 = vsub.s32 %v119, 2
    %vm121 = vcmp.gt.s32.totalorder 0, %v120
    %v122 = vsel %vm121, 0, %v120
    %v123 = vsub.s32 32, %v122
    %v124 = vshll.u32 %v115, %v122
    %v125 = vshrl.u32 %v107, %v123
    %v126 = vor.u32 %v124, %v125
    %v127 = vsub.s32 4294967266, %v122
    %v128 = vadd.s32 %v127, 127
    %v129 = vshll.u32 %v128, 23
    %v130 = vor.u32 4788187, %v129
    %v131 = vand.u32 2147483647, %v130
    %v133 = vcvt.s32.f32 %v126
    %v134 = vmul.f32 %v133, %v131
    %v135 = vxor.u32 %v134, 2147483648
    %v136 = vsel %vm53, %v135, %v134
    %v137 = vsub.s32 4, %v113
    %v138 = vsel %vm53, %v137, %v113
    %v139 = vsel %vm52, %v50, %v136
    %v140 = vsel %vm52, 0, %v138
    %v141 = vcosq.f32.pop %v139
    %v142 = vsinq.f32.pop %v139
    %vm143 = vweird.f32 %v50
    %v144 = vand.u32 %v140, 3
    %vm145 = vcmp.lt.s32.totalorder %v144, 2
    %vm146 = vcmp.eq.s32.totalorder %v144, 0
    %v147 = vxor.u32 %v142, 2147483648
    %v148 = vsel %vm146, %v141, %v147
    %vm149 = vcmp.eq.s32.totalorder %v144, 2
    %v150 = vxor.u32 %v141, 2147483648
    %v151 = vsel %vm149, %v150, %v142
    %v152 = vsel %vm145, %v148, %v151
    %v153 = vsel %vm143, nan, %v152
    %154 = vst [vmem:[#allocation5] sm:$0x3] %v153
    %v155 = vand.u32 2147483647, %v50
    %vm156 = vcmp.le.f32.partialorder %v155, 0.7853982
    %vm157 = vcmp.lt.s32.totalorder %v50, 0
    %v158 = vand.u32 %v50, 2139095040
    %v159 = vshrl.u32 %v158, 23
    %v160 = vsub.s32 %v159, 127
    %v161 = vand.u32 2147483647, %v50
    %v162 = vand.u32 %v161, 8388607
    %v163 = vor.u32 %v162, 8388608
    %v164 = vsub.s32 0, %v163
    %v165 = vadd.s32 %v160, 1
    %vm166 = vcmp.gt.s32.totalorder %v165, 0
    %v167 = vsel %vm166, %v165, 0
    %v168 = vshrl.u32 %v167, 5
    %v169 = vand.u32 %v167, 31
    %v170 = vsub.s32 32, %v169
    %v171 = vshrl.u32 683565275, %v170
    %v172 = vshll.u32 683565275, %v169
    %v173 = vshrl.u32 2475754826, %v170
    %v174 = vor.u32 %v172, %v173
    %v175 = vshll.u32 2475754826, %v169
    %v176 = vshrl.u32 2131351028, %v170
    %v177 = vor.u32 %v175, %v176
    %v178 = vshll.u32 2131351028, %v169
    %v179 = vshrl.u32 2102212464, %v170
    %v180 = vor.u32 %v178, %v179
    %v181 = vshll.u32 2102212464, %v169
    %v182 = vshrl.u32 920167782, %v170
    %v183 = vor.u32 %v181, %v182
    %v184 = vshll.u32 920167782, %v169
    %v185 = vshrl.u32 1326507024, %v170
    %v186 = vor.u32 %v184, %v185
    %vm187 = vcmp.lt.s32.totalorder %v168, 1
    %vm188 = vcmp.lt.s32.totalorder %v168, 2
    %vm189 = vcmp.lt.s32.totalorder %v168, 3
    %vm190 = vcmp.lt.s32.totalorder %v168, 4
    %v191 = vsel %vm187, %v171, %v174
    %v192 = vsel %vm190, %v180, 2102212464
    %v193 = vsel %vm189, %v177, %v192
    %v194 = vsel %vm188, %v191, %v193
    %v195 = vsel %vm187, %v174, %v177
    %v196 = vsel %vm190, %v183, 920167782
    %v197 = vsel %vm189, %v180, %v196
    %v198 = vsel %vm188, %v195, %v197
    %v199 = vsel %vm187, %v177, %v180
    %v200 = vsel %vm190, %v186, 1326507024
    %v201 = vsel %vm189, %v183, %v200
    %v202 = vsel %vm188, %v199, %v201
    %v203 = vshll.u32 %v163, 8
    %v204 = vmul.u32.u64.compose %v203, %v202
    %v205 = vextract.low.u32 %v204
    %v206 = vextract.high.u32 %v204
    %v207 = vmul.u32.u64.compose %v203, %v198
    %v208 = vextract.low.u32 %v207
    %v209 = vextract.high.u32 %v207
    %v210 = vmul.u32 %v203, %v194
    %v211 = vadd.s32 %v206, %v208
    %vm212 = vc.u32 %v206, %v208
    %v213 = vadd.s32 %v209, 1
    %v214 = vsel %vm212, %v213, %v209
    %v215 = vadd.s32 %v210, %v214
    %v216 = vadd.s32 %v215, 536870912
    %v217 = vshrl.u32 %v216, 30
    %v218 = vshll.u32 %v217, 30
    %v219 = vsub.s32 %v215, %v218
    %vm220 = vcmp.lt.s32.totalorder %v219, 0
    %v221 = vsub.s32 0, %v219
    %v222 = vsel %vm220, %v221, %v219
    %v223 = vclz %v222
    %v224 = vsub.s32 %v223, 2
    %vm225 = vcmp.gt.s32.totalorder 0, %v224
    %v226 = vsel %vm225, 0, %v224
    %v227 = vsub.s32 32, %v226
    %v228 = vshll.u32 %v219, %v226
    %v229 = vshrl.u32 %v211, %v227
    %v230 = vor.u32 %v228, %v229
    %v231 = vsub.s32 4294967266, %v226
    %v232 = vadd.s32 %v231, 127
    %v233 = vshll.u32 %v232, 23
    %v234 = vor.u32 4788187, %v233
    %v235 = vand.u32 2147483647, %v234
    %v237 = vcvt.s32.f32 %v230
    %v238 = vmul.f32 %v237, %v235
    %v239 = vxor.u32 %v238, 2147483648
    %v240 = vsel %vm157, %v239, %v238
    %v241 = vsub.s32 4, %v217
    %v242 = vsel %vm157, %v241, %v217
    %v243 = vsel %vm156, %v50, %v240
    %v244 = vsel %vm156, 0, %v242
    %v245 = vcosq.f32.pop %v243
    %v246 = vsinq.f32.pop %v243
    %vm247 = vweird.f32 %v50
    %v248 = vadd.s32 %v244, 3
    %v249 = vand.u32 %v248, 3
    %vm250 = vcmp.lt.s32.totalorder %v249, 2
    %vm251 = vcmp.eq.s32.totalorder %v249, 0
    %v252 = vxor.u32 %v246, 2147483648
    %v253 = vsel %vm251, %v245, %v252
    %vm254 = vcmp.eq.s32.totalorder %v249, 2
    %v255 = vxor.u32 %v245, 2147483648
    %v256 = vsel %vm254, %v255, %v246
    %v257 = vsel %vm250, %v253, %v256
    %v258 = vsel %vm247, nan, %v257
    %259 = vst [vmem:[#allocation6] sm:$0x3] %v258
    // Predicated region
    $region14: #{tpu_custom_call.1} parent=1 // pred_check
      _
    $region15: #{tpu_custom_call.1} parent=1 // pred_check_branch
      %261 = sbr.rel (0) target = $region17
    $region16: #{tpu_custom_call.1} parent=1 // pred_region
      %s263 = ssub.s32 32, 32
      %264 = vsyncadd [#allocation4], %s263
      %s266 = sshll.u32 [#allocation5], 4
      %s267 = int_to_ptr.vmem [resolvable:$true] %s266
      %269 = dma.vmem_to_hbm [thread:$0]  %s267, 32, %s2, [#allocation4]
    $region17: #{tpu_custom_call.1} parent=1 // pred_fallthru
      _
    // Predicated region
    $region18: #{tpu_custom_call.1} parent=1 // pred_check
      _
    $region19: #{tpu_custom_call.1} parent=1 // pred_check_branch
      %271 = sbr.rel (0) target = $region21
    $region20: #{tpu_custom_call.1} parent=1 // pred_region
      %s273 = ssub.s32 32, 32
      %274 = vsyncadd [#allocation7], %s273
      %s276 = sshll.u32 [#allocation6], 4
      %s277 = int_to_ptr.vmem [resolvable:$true] %s276
      %279 = dma.vmem_to_hbm [thread:$0]  %s277, 32, %s3, [#allocation7]
    $region21: #{tpu_custom_call.1} parent=1 // pred_fallthru
      _
    // Predicated region
    $region22: #{tpu_custom_call.1} parent=1 // pred_check
      _
    $region23: #{tpu_custom_call.1} parent=1 // pred_check_branch
      %281 = sbr.rel (0) target = $region25
    $region24: #{tpu_custom_call.1} parent=1 // pred_region
      %282 = dma.done [#allocation4], 32
    $region25: #{tpu_custom_call.1} parent=1 // pred_fallthru
      _
    // Predicated region
    $region26: #{tpu_custom_call.1} parent=1 // pred_check
      _
    $region27: #{tpu_custom_call.1} parent=1 // pred_check_branch
      %284 = sbr.rel (0) target = $region29
    $region28: #{tpu_custom_call.1} parent=1 // pred_region
      %285 = dma.done [#allocation7], 32
    $region29: #{tpu_custom_call.1} parent=1 // pred_fallthru
      _
    %286 = vsyncpa [#allocation3], 1
    %287 = vsyncpa [#allocation4], 1
    %288 = vsyncpa [#allocation7], 1

</llo_original>
